<compile_context>
chip_gen: v7x
topology: tpu7x:2x2x1
jax: 0.10.0
libtpu: 0.0.40
codegen_flags: <defaults>
</compile_context>

<pallas_src>
import collections
import functools
import math

import jax
import jax.numpy as jnp
from jax.experimental import pallas as pl
from jax.experimental.pallas import tpu as pltpu


def _round_up(x, m):
    return ((x + m - 1) // m) * m


def _pick_lane_tile(num_tokens):
    # <=256 tokens: one tile; otherwise 256-wide tiles (>=2 grid steps so the
    # pipeline overlaps and both v7x TensorCores get work).
    t128 = _round_up(max(num_tokens, 1), 128)
    return t128 if t128 <= 256 else 256


# ----------------------------------------------------------------------------
# Pallas kernel: one lane tile of tokens, all (pattern, slot) log-pdfs.
# ----------------------------------------------------------------------------
def _logpdf_kernel(x_ref, a_ref, g_ref, out_ref, *, split):
    """x_ref : (H+1, L) bf16   rows 0..H-1 = x^T (tokens on lanes), row H = 1
       a_ref : (R, H+1)  bf16  R = VKC_pad + H + VK; rows are
                               [U'^T per slot | I_H pass-through | b_mat,bias]
       g_ref : (VK, VKC_pad+H) bf16  [0.5*group indicator | -0.5*s^2]
       out   : (VK, L)   f32"""
    x = x_ref[...]
    # Single fused projection matmul on the MXU (bf16 in, f32 accumulate).
    p = jnp.dot(a_ref[...], x, preferred_element_type=jnp.float32)       # (R, L)
    top = p[:split, :]        # (VKC_pad + H, L): [x@U' rows ; x pass-through]
    linb = p[split:, :]       # (VK, L): bias + x.b   (already summed)
    # Quadratic terms: square in f32 on the VPU, group-reduce on the MXU.
    sq = (top * top).astype(g_ref.dtype)
    quad = jnp.dot(g_ref[...], sq, preferred_element_type=jnp.float32)   # (VK, L)
    out_ref[...] = quad + linb


# ----------------------------------------------------------------------------
# Wrapper-side preprocessing (runs once per match, constants folded in f32).
# ----------------------------------------------------------------------------
def build_token_matrix(search_states, lane_tile):
    """(B, N, H) -> lane-dense bf16 token matrix (H+1, T_pad) with a ones row."""
    B, N, H = search_states.shape
    T = B * N
    T_pad = _round_up(max(T, 1), lane_tile)
    # TODO(synk): producing activations already in (H, tokens) layout upstream
    # would avoid this extra XLA transpose pass over the activations in HBM.
    x_t = jnp.transpose(search_states.reshape(T, H).astype(jnp.float32))  # (H, T)
    x_t = jnp.pad(x_t, ((0, 0), (0, T_pad - T)))
    x_aug = jnp.concatenate([x_t, jnp.ones((1, T_pad), jnp.float32)], axis=0)
    return x_aug.astype(jnp.bfloat16), T, T_pad


def _fold_constants(mean, u_norm, det_term, log_cov_shift, hidden_size):
    """Fold scale / mean / determinant into the two matmul operands A and G."""
    V, K, H, C = u_norm.shape
    assert H == hidden_size
    VK = V * K
    VKC = VK * C
    VKC_pad = _round_up(VKC, 8)     # sublane-align the in-kernel slice points

    shift = jnp.asarray(log_cov_shift, jnp.float32)
    s = jnp.exp(-0.5 * shift)
    s2 = s * s

    mean_flat = mean.reshape(VK, H).astype(jnp.float32)                   # (VK, H)
    u_prime = u_norm.reshape(VK, H, C).astype(jnp.float32) * s            # (VK, H, C)
    det_flat = det_term.reshape(VK).astype(jnp.float32)                   # (VK,)

    mu_u = jnp.einsum('vh,vhc->vc', mean_flat, u_prime)                   # (VK, C)
    b_mat = s2 * mean_flat - jnp.einsum('vhc,vc->vh', u_prime, mu_u)      # (VK, H)
    const = -0.5 * H * math.log(2.0 * math.pi)
    bias = (const + det_flat
            - 0.5 * s2 * jnp.sum(mean_flat * mean_flat, axis=-1)
            + 0.5 * jnp.sum(mu_u * mu_u, axis=-1))                        # (VK,)

    u_all_t = jnp.transpose(u_prime, (0, 2, 1)).reshape(VKC, H)           # (VKC, H)

    R = VKC_pad + H + VK
    a_mat = jnp.zeros((R, H + 1), jnp.float32)
    a_mat = a_mat.at[:VKC, :H].set(u_all_t)
    a_mat = a_mat.at[VKC_pad:VKC_pad + H, :H].set(jnp.eye(H, dtype=jnp.float32))
    a_mat = a_mat.at[VKC_pad + H:, :H].set(b_mat)
    a_mat = a_mat.at[VKC_pad + H:, H].set(bias)

    # Group reducer: 0.5 * sum_c (xU'_vk,c)^2  -  0.5 * s^2 * ||x||^2 in one dot.
    # TODO(synk): this indicator matmul is O(VK^2*C) MACs; swap for a per-slot
    # reshape+sum if VK grows beyond ~16 in production.
    g_ind = 0.5 * jnp.kron(jnp.eye(VK, dtype=jnp.float32),
                           jnp.ones((1, C), jnp.float32))                 # (VK, VKC)
    g_mat = jnp.concatenate(
        [g_ind,
         jnp.zeros((VK, VKC_pad - VKC), jnp.float32),
         (-0.5 * s2) * jnp.ones((VK, H), jnp.float32)], axis=1)           # (VK, VKC_pad+H)

    return a_mat.astype(jnp.bfloat16), g_mat.astype(jnp.bfloat16), VK, VKC_pad


def pattern_log_pdf_tokens(x_aug, a_mat, g_mat, vk, vkc_pad, hidden_size,
                           lane_tile):
    """Run the Pallas kernel over the lane-tiled token matrix -> (VK, T_pad)."""
    Hp1, T_pad = x_aug.shape
    H = hidden_size
    R = a_mat.shape[0]
    num_tiles = T_pad // lane_tile

    kernel = functools.partial(_logpdf_kernel, split=vkc_pad + H)

    x_spec_kwargs = {}
    if num_tiles >= 3:
        # H=32 contraction makes per-tile compute short; a third buffer hides
        # any exposed x DMA latency.
        x_spec_kwargs["pipeline_mode"] = pl.Buffered(3)

    flops = 2 * T_pad * (R * Hp1 + vk * (vkc_pad + H))
    bytes_accessed = (Hp1 * T_pad * 2 + R * Hp1 * 2
                      + vk * (vkc_pad + H) * 2 + vk * T_pad * 4)

    # VMEM budget (safe for v7x's 64 MiB physical / 32 MiB scoped default):
    # buffered x tiles + dot intermediates + out tiles + resident constants.
    vmem_est = ((3 * Hp1 + 2 * R + 2 * vk) * lane_tile * 4
                + R * Hp1 * 2 + vk * (vkc_pad + H) * 2)
    vmem_limit = int(min(32 << 20, max(2 * vmem_est, 4 << 20)))

    grid_spec = pltpu.PrefetchScalarGridSpec(
        num_scalar_prefetch=0,
        grid=(num_tiles,),
        in_specs=[
            pl.BlockSpec((Hp1, lane_tile), lambda t: (0, t), **x_spec_kwargs),
            pl.BlockSpec((R, Hp1), lambda t: (0, 0)),             # resident A
            pl.BlockSpec((vk, vkc_pad + H), lambda t: (0, 0)),    # resident G
        ],
        out_specs=pl.BlockSpec((vk, lane_tile), lambda t: (0, t)),
    )

    return pl.pallas_call(
        kernel,
        grid_spec=grid_spec,
        out_shape=jax.ShapeDtypeStruct((vk, T_pad), jnp.float32),
        compiler_params=pltpu.CompilerParams(
            dimension_semantics=("parallel",),
            vmem_limit_bytes=vmem_limit),
        cost_estimate=pl.CostEstimate(flops=flops, transcendentals=0,
                                      bytes_accessed=bytes_accessed),
    )(x_aug, a_mat, g_mat)


def pattern_log_pdf(search_states, mean, u_norm, det_term, log_cov_shift):
    """log_pdf[b, v, k, n] of every node n against every (pattern v, slot k)."""
    B, N, H = search_states.shape
    V, K = mean.shape[0], mean.shape[1]
    lane_tile = _pick_lane_tile(B * N)
    x_aug, T, _ = build_token_matrix(search_states, lane_tile)
    a_mat, g_mat, vk, vkc_pad = _fold_constants(mean, u_norm, det_term,
                                                log_cov_shift, H)
    flat = pattern_log_pdf_tokens(x_aug, a_mat, g_mat, vk, vkc_pad, H, lane_tile)
    flat = flat[:, :T].reshape(V, K, B, N)
    return jnp.transpose(flat, (2, 0, 1, 3))          # (B, V, K, N)


# ----------------------------------------------------------------------------
# Module-level glue (parameters + SVD preprocessing), mirroring __init__.
# ----------------------------------------------------------------------------
def datan_exp_h(t):
    return jax.lax.rsqrt(1.0 + jnp.exp(t))


class SaccadicViTMultiStatePatternPallas:
    def __init__(self, num_patterns, hidden_size, covariance_dim, beam_size,
                 log_covariance_shift, key):
        self.num_patterns = dict(num_patterns)
        self.hidden_size = hidden_size
        self.covariance_dim = covariance_dim
        self.beam_size = beam_size
        self.mean = {}
        self.std = {}
        for k, v in self.num_patterns.items():
            key, km, ks = jax.random.split(key, 3)
            self.mean[k] = jax.random.normal(km, (v, k, hidden_size), jnp.float32)
            self.std[k] = jax.random.normal(
                ks, (v, k, hidden_size, covariance_dim), jnp.float32)
        self.log_covariance_shift = jnp.asarray(log_covariance_shift, jnp.float32)
        self.max_k = max(self.num_patterns.keys())

    def _preprocess(self, k):
        cov = self.std[k]                                            # (V, K, H, C)
        # torch.svd(some=True): cov = U diag(S) V^T, U:(...,H,C), S:(...,C)
        U, S, _ = jnp.linalg.svd(cov, full_matrices=False)
        logL = 2.0 * jnp.log(S) - self.log_covariance_shift          # (V, K, C)
        u_norm = U * datan_exp_h(-logL)[..., None, :]                # (V, K, H, C)
        det_term = -0.5 * (self.hidden_size * self.log_covariance_shift
                           + jnp.sum(jax.nn.softplus(logL), axis=-1))
        return u_norm, det_term

    def match_joint_log_pdf(self, hidden_states, context_states):
        # Iteration-0 semantics of `match` (it == 0): if there are hidden
        # nodes, search only them; otherwise search hidden+context.
        if hidden_states.shape[-2] > 0:
            search_states = hidden_states
        else:
            search_states = jnp.concatenate((hidden_states, context_states),
                                            axis=-2)
        B, N, H = search_states.shape
        lane_tile = _pick_lane_tile(B * N)
        # Token matrix built once and shared across all pattern-complexity
        # groups (single pass over the activations).
        x_aug, T, _ = build_token_matrix(search_states, lane_tile)
        # TODO(synk): the subsequent beam top-k selection, wildcard-slot
        # gather/scatter and conditional mean/covariance rank-1 updates rely on
        # data-dependent boolean indexing (torch.where with dynamic output
        # shapes) and have no static Pallas/JAX equivalent; not implemented.
        out = collections.OrderedDict()
        for k in self.num_patterns:
            V = self.num_patterns[k]
            u_norm, det_term = self._preprocess(k)
            a_mat, g_mat, vk, vkc_pad = _fold_constants(
                self.mean[k], u_norm, det_term, self.log_covariance_shift, H)
            flat = pattern_log_pdf_tokens(x_aug, a_mat, g_mat, vk, vkc_pad, H,
                                          lane_tile)
            flat = flat[:, :T].reshape(V, k, B, N)
            out[k] = jnp.transpose(flat, (2, 0, 1, 3))   # (B, V, K, N)
        return out


class AbstractSaccadicViTPredictorPallas:
    def __init__(self, num_patterns, hidden_size, covariance_dim, beam_size,
                 log_covariance_shift, key):
        self.pattern = SaccadicViTMultiStatePatternPallas(
            num_patterns, hidden_size, covariance_dim, beam_size,
            log_covariance_shift, key)

    # forward() is abstract in the reference module; the owned compute is the
    # pattern match, exposed here.
    def match(self, hidden_states, context_states):
        return self.pattern.match_joint_log_pdf(hidden_states, context_states)


# ----------------------------------------------------------------------------
# Pure-JAX reference of the same log-pdf math (direct, demeaned form, f32).
# ----------------------------------------------------------------------------
def _ref_log_pdf(search_states, mean, u_norm, det_term, shift, hidden_size):
    scale = jnp.exp(-0.5 * shift)
    demean = search_states[:, None, None, :, :] - mean[None, :, :, None, :]
    scaled = demean * scale
    nd = jnp.einsum("bvknh,vkhc->bvknc", scaled, u_norm,
                    precision=jax.lax.Precision.HIGHEST)
    exponent = -0.5 * (jnp.sum(scaled * scaled, -1) - jnp.sum(nd * nd, -1))
    const = -0.5 * hidden_size * math.log(2.0 * math.pi)
    return const + det_term[None, :, :, None] + exponent


if __name__ == "__main__":
    key = jax.random.PRNGKey(0)
    k_params, k_hidden, k_context = jax.random.split(key, 3)

    # Small config consistent with the module's __init__.
    num_patterns = {2: 3, 3: 2}          # {pattern complexity k: num patterns v}
    hidden_size = 32
    covariance_dim = 8
    beam_size = 4
    log_covariance_shift = 0.1

    B, N, M = 2, 8, 8                     # batch, hidden nodes, context nodes
    hidden_states = jax.random.normal(k_hidden, (B, N, hidden_size), jnp.float32)
    context_states = jax.random.normal(k_context, (B, M, hidden_size), jnp.float32)

    predictor = AbstractSaccadicViTPredictorPallas(
        num_patterns, hidden_size, covariance_dim, beam_size,
        log_covariance_shift, k_params)

    out = predictor.match(hidden_states, context_states)
    jax.block_until_ready(out)

    # Validate against a pure-JAX reference of the same math.
    for k in num_patterns:
        u_norm, det_term = predictor.pattern._preprocess(k)
        ref = _ref_log_pdf(hidden_states, predictor.pattern.mean[k], u_norm,
                           det_term, predictor.pattern.log_covariance_shift,
                           hidden_size)
        assert out[k].shape == ref.shape, (out[k].shape, ref.shape)
        assert jnp.allclose(out[k], ref, rtol=2e-2, atol=2e-2), (
            f"mismatch for k={k}: max err "
            f"{jnp.max(jnp.abs(out[k] - ref))}")

    print("KERNEL_OK")
</pallas_src>

<mosaic_0001>
module attributes {stable_mosaic.version = 11 : i64} {
  func.func @_logpdf_kernel(%arg0: i32, %arg1: memref<33x128xbf16, #tpu.memory_space<vmem>>, %arg2: memref<86x33xbf16, #tpu.memory_space<vmem>>, %arg3: memref<6x80xbf16, #tpu.memory_space<vmem>>, %arg4: memref<6x128xf32, #tpu.memory_space<vmem>>) attributes {dimension_semantics = [#tpu.dimension_semantics<parallel>], iteration_bounds = array<i64: 1>, scalar_prefetch = 0 : i64, scratch_operands = 0 : i64, tpu.core_type = #tpu.core_type<tc>, window_params = [{transform_indices = @transform_0, window_bounds = array<i64: 33, 128>}, {pipeline_mode = #tpu.pipeline_mode<synchronous>, transform_indices = @transform_1, window_bounds = array<i64: 86, 33>}, {pipeline_mode = #tpu.pipeline_mode<synchronous>, transform_indices = @transform_2, window_bounds = array<i64: 6, 80>}, {transform_indices = @transform_3, window_bounds = array<i64: 6, 128>}]} {
    %c0 = arith.constant 0 : index
    %c0_0 = arith.constant 0 : index
    %0 = vector.load %arg1[%c0, %c0_0] : memref<33x128xbf16, #tpu.memory_space<vmem>>, vector<33x128xbf16>
    %c0_1 = arith.constant 0 : index
    %c0_2 = arith.constant 0 : index
    %1 = vector.load %arg2[%c0_1, %c0_2] : memref<86x33xbf16, #tpu.memory_space<vmem>>, vector<86x33xbf16>
    %cst = arith.constant dense<0.000000e+00> : vector<86x128xf32>
    %2 = tpu.matmul %1, %0, %cst {dimension_numbers = #tpu.dot_dimension_numbers<[1], [0], [0], [1], [0, 0, 1, 1], [], []>} : vector<86x33xbf16>, vector<33x128xbf16>, vector<86x128xf32> -> vector<86x128xf32>
    %3 = vector.extract_strided_slice %2 {offsets = [0, 0], sizes = [80, 128], strides = [1, 1]} : vector<86x128xf32> to vector<80x128xf32>
    %4 = vector.extract_strided_slice %2 {offsets = [80, 0], sizes = [6, 128], strides = [1, 1]} : vector<86x128xf32> to vector<6x128xf32>
    %5 = arith.mulf %3, %3 : vector<80x128xf32>
    %6 = arith.truncf %5 : vector<80x128xf32> to vector<80x128xbf16>
    %c0_3 = arith.constant 0 : index
    %c0_4 = arith.constant 0 : index
    %7 = vector.load %arg3[%c0_3, %c0_4] : memref<6x80xbf16, #tpu.memory_space<vmem>>, vector<6x80xbf16>
    %cst_5 = arith.constant dense<0.000000e+00> : vector<6x128xf32>
    %8 = tpu.matmul %7, %6, %cst_5 {dimension_numbers = #tpu.dot_dimension_numbers<[1], [0], [0], [1], [0, 0, 1, 1], [], []>} : vector<6x80xbf16>, vector<80x128xbf16>, vector<6x128xf32> -> vector<6x128xf32>
    %9 = arith.addf %8, %4 : vector<6x128xf32>
    %c0_6 = arith.constant 0 : index
    %c0_7 = arith.constant 0 : index
    %10 = vector.load %arg4[%c0_6, %c0_7] : memref<6x128xf32, #tpu.memory_space<vmem>>, vector<6x128xf32>
    tpu.vector_store %arg4[%c0_6, %c0_7], %9 {strides = array<i32>} : memref<6x128xf32, #tpu.memory_space<vmem>>, vector<6x128xf32>,
    return
  }
  func.func @transform_0(%arg0: i32) -> (i32, i32) {
    %c0_i32 = arith.constant 0 : i32
    %c0_i32_0 = arith.constant 0 : i32
    return %c0_i32, %arg0 : i32, i32
  }
  func.func @transform_1(%arg0: i32) -> (i32, i32) {
    %c0_i32 = arith.constant 0 : i32
    %c0_i32_0 = arith.constant 0 : i32
    %c0_i32_1 = arith.constant 0 : i32
    return %c0_i32, %c0_i32_0 : i32, i32
  }
  func.func @transform_2(%arg0: i32) -> (i32, i32) {
    %c0_i32 = arith.constant 0 : i32
    %c0_i32_0 = arith.constant 0 : i32
    %c0_i32_1 = arith.constant 0 : i32
    return %c0_i32, %c0_i32_0 : i32, i32
  }
  func.func @transform_3(%arg0: i32) -> (i32, i32) {
    %c0_i32 = arith.constant 0 : i32
    %c0_i32_0 = arith.constant 0 : i32
    return %c0_i32, %arg0 : i32, i32
  }
}

</mosaic_0001>

<llo_original>
// kernel: tpu_custom_call.1
$region0: #{tpu_custom_call.1}
  #allocation0 [shape = 'u32[]', space=smem, size = 0x4, offset = 0x4, fixed_abs, tag = 'smem constant byte address 0x4 - core index']
  #allocation1 [shape = 'u32[144,128]{1,0:T(1,128)}', space=vmem, size = 0x12000, scoped, tag = 'internal scratch']
  %s0 = inlined_call_operand.vmem [shape: bf16[33,128], index: 0, kind: input, shape index: {}]
  %s1 = inlined_call_operand.vmem [shape: bf16[86,33], index: 1, kind: input, shape index: {}]
  %s2 = inlined_call_operand.vmem [shape: bf16[6,80], index: 2, kind: input, shape index: {}]
  %s3 = inlined_call_operand.hbm [shape: f32[6,128], index: 3, kind: output, shape index: {}]
  %s4 = sld [smem:[#allocation0]]
  $region22: #{tpu_custom_call.1} parent=0
    _
  %s6 = ssub.s32 1, %s4
  %s7 = scalar_select 0, %s6, %s4
  $region1: #{tpu_custom_call.1} parent=0
    #allocation2 [shape = 'u8[4096]{0}', space=vmem, size = 0x1000, scoped, tag = 'output window, operand 0, single buffered']
    #allocation3 [shape = 's32[1]{0}', space=sflag, size = 0x4, scoped, tag = 'scoped memory for tpu_custom_call.1']
    %8 = vsyncpa [#allocation3], 0
    // Predicated region
    $region2: #{tpu_custom_call.1} parent=1 // pred_check
      _
    $region3: #{tpu_custom_call.1} parent=1 // pred_check_branch
      %10 = sbr.rel (0) target = $region5
    $region4: #{tpu_custom_call.1} parent=1 // pred_region
      _
    $region5: #{tpu_custom_call.1} parent=1 // pred_fallthru
      _
    // Predicated region
    $region6: #{tpu_custom_call.1} parent=1 // pred_check
      _
    $region7: #{tpu_custom_call.1} parent=1 // pred_check_branch
      %12 = sbr.rel (0) target = $region9
    $region8: #{tpu_custom_call.1} parent=1 // pred_region
      _
    $region9: #{tpu_custom_call.1} parent=1 // pred_fallthru
      _
    // Predicated region
    $region10: #{tpu_custom_call.1} parent=1 // pred_check
      _
    $region11: #{tpu_custom_call.1} parent=1 // pred_check_branch
      %14 = sbr.rel (0) target = $region13
    $region12: #{tpu_custom_call.1} parent=1 // pred_region
      _
    $region13: #{tpu_custom_call.1} parent=1 // pred_fallthru
      _
    %v16 = vld [vmem:[%s0] sm:$0xf]
    %v17 = vld [vmem:[%s0 + $0x4] sm:$0xf]
    %v18 = vld [vmem:[%s0 + $0x8] sm:$0xf]
    %v19 = vld [vmem:[%s0 + $0xc] sm:$0xf]
    %v20 = vld [vmem:[%s0 + $0x10] sm:$0x1]
    %v21 = vld [vmem:[%s1] sm:$0xf]
    %v22 = vld [vmem:[%s1 + $0x4] sm:$0xf]
    %v23 = vld [vmem:[%s1 + $0x8] sm:$0xf]
    %v24 = vld [vmem:[%s1 + $0xc] sm:$0xf]
    %v25 = vld [vmem:[%s1 + $0x10] sm:$0xf]
    %v26 = vld [vmem:[%s1 + $0x14] sm:$0xf]
    %v27 = vld [vmem:[%s1 + $0x18] sm:$0xf]
    %v28 = vld [vmem:[%s1 + $0x1c] sm:$0xf]
    %v29 = vld [vmem:[%s1 + $0x20] sm:$0xf]
    %v30 = vld [vmem:[%s1 + $0x24] sm:$0xf]
    %v31 = vld [vmem:[%s1 + $0x28] sm:$0x7]
    %v43 = vunpack.c.l.b16 %v21
    %v44 = vunpack.c.l.b16 %v22
    %v45 = vunpack.c.l.b16 %v23
    %v46 = vunpack.c.l.b16 %v24
    %v47 = vunpack.c.l.b16 %v25
    %v48 = vunpack.c.l.b16 %v26
    %v49 = vunpack.c.l.b16 %v27
    %v50 = vunpack.c.l.b16 %v28
    %v51 = vunpack.c.l.b16 %v29
    %v52 = vunpack.c.l.b16 %v30
    %v53 = vunpack.c.l.b16 %v31
    %v54 = vpack.c.b16 %v44, %v43
    %v55 = vpack.c.b16 %v46, %v45
    %v56 = vpack.c.b16 %v48, %v47
    %v57 = vpack.c.b16 %v50, %v49
    %v58 = vpack.c.b16 %v52, %v51
    %v59 = vpack.c.b16 %v53, %v53
    %v65 = vunpack.c.l.b16 %v16
    %v66 = vunpack.c.l.b16 %v17
    %v67 = vunpack.c.l.b16 %v18
    %v68 = vunpack.c.l.b16 %v19
    %v69 = vunpack.c.l.b16 %v20
    %v70 = vpack.c.b16 %v66, %v65
    %v71 = vpack.c.b16 %v68, %v67
    %v72 = vpack.c.b16 %v69, %v69
    %vm75 = vcmask 269312
    %v77 = vsel %vm75, %v54, 0
    %v80 = vsel %vm75, %v55, 0
    %v83 = vsel %vm75, %v56, 0
    %v86 = vsel %vm75, %v57, 0
    %v89 = vsel %vm75, %v58, 0
    %v92 = vsel %vm75, %v59, 0
    %vm94 = vcmask 1040384
    %v95 = vsel 0, 4294967295, 65535
    %v96 = vsel %vm94, %v95, 0
    %v98 = vand.u32 %v72, %v96
    %100 = vmatprep.subr.bf16.mxu0 0
    %101 = vmatpush1.bf16.msra.mxu0 %v70
    %102 = vmatprep.subr.bf16.mxu0 0
    %103 = vmatpush1.bf16.msra.mxu0 %v71
    %104 = vmatprep.subr.bf16.mxu0 0
    %105 = vmatpush1.bf16.msra.mxu0 %v98
    %106 = vmatprep.subr.bf16.mxu0 0
    %107 = vmatpush1.bf16.msra.mxu0 0
    %108 = vmatprep.subr.bf16.mxu0 0
    %109 = vmatpush1.bf16.msra.mxu0 0
    %110 = vmatprep.subr.bf16.mxu0 0
    %111 = vmatpush1.bf16.msra.mxu0 0
    %112 = vmatprep.subr.bf16.mxu0 0
    %113 = vmatpush1.bf16.msra.mxu0 0
    %114 = vmatprep.subr.bf16.mxu0 0
    %115 = vmatpush1.bf16.msra.mxu0 0
    %116 = vmatprep.subr.bf16.mxu0 0
    %117 = vmatpush1.bf16.msra.mxu0 0
    %118 = vmatprep.subr.bf16.mxu0 0
    %119 = vmatpush1.bf16.msra.mxu0 0
    %120 = vmatprep.subr.bf16.mxu0 0
    %121 = vmatpush1.bf16.msra.mxu0 0
    %122 = vmatprep.subr.bf16.mxu0 0
    %123 = vmatpush1.bf16.msra.mxu0 0
    %124 = vmatprep.subr.bf16.mxu0 0
    %125 = vmatpush1.bf16.msra.mxu0 0
    %126 = vmatprep.subr.bf16.mxu0 0
    %127 = vmatpush1.bf16.msra.mxu0 0
    %128 = vmatprep.subr.bf16.mxu0 0
    %129 = vmatpush1.bf16.msra.mxu0 0
    %130 = vmatprep.subr.bf16.mxu0 0
    %131 = vmatpush1.bf16.msra.mxu0 0
    %132 = vmatprep.mubr.bf16.mxu0 0
    %133 = vmatmul.mubr.bf16.gmra.mrb[0].mxu0 %v77
    %v134 = vpop.f32.mrb[0].mxu0
    %v135 = vadd.f32 0.0, %v134
    %v136 = vpop.f32.mrb[0].mxu0
    %v137 = vpop.f32.mrb[0].mxu0
    %v138 = vadd.f32 0.0, %v137
    %v139 = vpop.f32.mrb[0].mxu0
    %140 = vmatprep.mubr.bf16.mxu0 0
    %141 = vmatmul.mubr.bf16.gmra.mrb[0].mxu0 %v80
    %v142 = vpop.f32.mrb[0].mxu0
    %v143 = vadd.f32 0.0, %v142
    %v144 = vpop.f32.mrb[0].mxu0
    %v145 = vpop.f32.mrb[0].mxu0
    %v146 = vadd.f32 0.0, %v145
    %v147 = vpop.f32.mrb[0].mxu0
    %148 = vmatprep.mubr.bf16.mxu0 0
    %149 = vmatmul.mubr.bf16.gmra.mrb[0].mxu0 %v83
    %v150 = vpop.f32.mrb[0].mxu0
    %v151 = vadd.f32 0.0, %v150
    %v152 = vpop.f32.mrb[0].mxu0
    %v153 = vpop.f32.mrb[0].mxu0
    %v154 = vadd.f32 0.0, %v153
    %v155 = vpop.f32.mrb[0].mxu0
    %156 = vmatprep.mubr.bf16.mxu0 0
    %157 = vmatmul.mubr.bf16.gmra.mrb[0].mxu0 %v86
    %v158 = vpop.f32.mrb[0].mxu0
    %v159 = vadd.f32 0.0, %v158
    %v160 = vpop.f32.mrb[0].mxu0
    %v161 = vpop.f32.mrb[0].mxu0
    %v162 = vadd.f32 0.0, %v161
    %v163 = vpop.f32.mrb[0].mxu0
    %164 = vmatprep.mubr.bf16.mxu0 0
    %165 = vmatmul.mubr.bf16.gmra.mrb[0].mxu0 %v89
    %v166 = vpop.f32.mrb[0].mxu0
    %v167 = vadd.f32 0.0, %v166
    %v168 = vpop.f32.mrb[0].mxu0
    %v169 = vpop.f32.mrb[0].mxu0
    %v170 = vadd.f32 0.0, %v169
    %v171 = vpop.f32.mrb[0].mxu0
    %172 = vmatprep.mubr.bf16.mxu0 0
    %173 = vmatmul.mubr.bf16.gmra.mrb[0].mxu0 %v92
    %v174 = vpop.f32.mrb[0].mxu0
    %v175 = vadd.f32 0.0, %v174
    %v176 = vpop.f32.mrb[0].mxu0
    %v177 = vpop.f32.mrb[0].mxu0
    %v178 = vpop.f32.mrb[0].mxu0
    %179 = vdwg.mxu0
    %v180 = vmul.f32 %v135, %v135
    %v181 = vmul.f32 %v138, %v138
    %v182 = vmul.f32 %v143, %v143
    %v183 = vmul.f32 %v146, %v146
    %v184 = vmul.f32 %v151, %v151
    %v185 = vmul.f32 %v154, %v154
    %v186 = vmul.f32 %v159, %v159
    %v187 = vmul.f32 %v162, %v162
    %v188 = vmul.f32 %v167, %v167
    %v189 = vmul.f32 %v170, %v170
    %v190 = vpack.c.bf16 %v181, %v180
    %v191 = vpack.c.bf16 %v183, %v182
    %v192 = vpack.c.bf16 %v185, %v184
    %v193 = vpack.c.bf16 %v187, %v186
    %v194 = vpack.c.bf16 %v189, %v188
    %v195 = vld [vmem:[%s2] sm:$0x7]
    %vm196 = vcmask 654336
    %v198 = vsel %vm196, %v195, 0
    %200 = vmatprep.subr.bf16.mxu0 0
    %201 = vmatpush1.bf16.msra.mxu0 %v190
    %202 = vmatprep.subr.bf16.mxu0 0
    %203 = vmatpush1.bf16.msra.mxu0 %v191
    %204 = vmatprep.subr.bf16.mxu0 0
    %205 = vmatpush1.bf16.msra.mxu0 %v192
    %206 = vmatprep.subr.bf16.mxu0 0
    %207 = vmatpush1.bf16.msra.mxu0 %v193
    %208 = vmatprep.subr.bf16.mxu0 0
    %209 = vmatpush1.bf16.msra.mxu0 %v194
    %210 = vmatprep.subr.bf16.mxu0 0
    %211 = vmatpush1.bf16.msra.mxu0 0
    %212 = vmatprep.subr.bf16.mxu0 0
    %213 = vmatpush1.bf16.msra.mxu0 0
    %214 = vmatprep.subr.bf16.mxu0 0
    %215 = vmatpush1.bf16.msra.mxu0 0
    %216 = vmatprep.subr.bf16.mxu0 0
    %217 = vmatpush1.bf16.msra.mxu0 0
    %218 = vmatprep.subr.bf16.mxu0 0
    %219 = vmatpush1.bf16.msra.mxu0 0
    %220 = vmatprep.subr.bf16.mxu0 0
    %221 = vmatpush1.bf16.msra.mxu0 0
    %222 = vmatprep.subr.bf16.mxu0 0
    %223 = vmatpush1.bf16.msra.mxu0 0
    %224 = vmatprep.subr.bf16.mxu0 0
    %225 = vmatpush1.bf16.msra.mxu0 0
    %226 = vmatprep.subr.bf16.mxu0 0
    %227 = vmatpush1.bf16.msra.mxu0 0
    %228 = vmatprep.subr.bf16.mxu0 0
    %229 = vmatpush1.bf16.msra.mxu0 0
    %230 = vmatprep.subr.bf16.mxu0 0
    %231 = vmatpush1.bf16.msra.mxu0 0
    %232 = vmatprep.mubr.bf16.mxu0 0
    %233 = vmatmul.mubr.bf16.gmra.mrb[0].mxu0 %v198
    %v234 = vpop.f32.mrb[0].mxu0
    %v235 = vadd.f32 %v175, %v234
    %v236 = vpop.f32.mrb[0].mxu0
    %v237 = vpop.f32.mrb[0].mxu0
    %v238 = vpop.f32.mrb[0].mxu0
    %239 = vdwg.mxu0
    %240 = vst [vmem:[#allocation2] sm:$0x3f] %v235
    // Predicated region
    $region14: #{tpu_custom_call.1} parent=1 // pred_check
      _
    $region15: #{tpu_custom_call.1} parent=1 // pred_check_branch
      %242 = sbr.rel (0) target = $region17
    $region16: #{tpu_custom_call.1} parent=1 // pred_region
      %s244 = ssub.s32 128, 128
      %245 = vsyncadd [#allocation3], %s244
      %s247 = sshll.u32 [#allocation2], 4
      %s248 = int_to_ptr.vmem [resolvable:$true] %s247
      %250 = dma.vmem_to_hbm [thread:$0]  %s248, 128, %s3, [#allocation3]
    $region17: #{tpu_custom_call.1} parent=1 // pred_fallthru
      _
    // Predicated region
    $region18: #{tpu_custom_call.1} parent=1 // pred_check
      _
    $region19: #{tpu_custom_call.1} parent=1 // pred_check_branch
      %252 = sbr.rel (0) target = $region21
    $region20: #{tpu_custom_call.1} parent=1 // pred_region
      %253 = dma.done [#allocation3], 128
    $region21: #{tpu_custom_call.1} parent=1 // pred_fallthru
      _
    %254 = vsyncpa [#allocation3], 1

</llo_original>
